<compile_context>
chip_gen: v5e
topology: v5e:2x2
jax: 0.10.0
libtpu: 0.0.40
codegen_flags: <defaults>
</compile_context>

<pallas_src>
from functools import partial

import jax
import jax.numpy as jnp
from jax.experimental import pallas as pl
from jax.experimental.pallas import tpu as pltpu


def _encoder_kernel(x_ref, w_ref, scale_ref, shift_ref, ctx_ref, o_ref):
    """One (batch b, HW-tile t) grid step.

    x_ref:     (Cin,  THW)  activation tile (batch dim squeezed)
    w_ref:     (Cin,  Cout) bf16 block-diagonal grouped-conv weight (transposed)
    scale_ref: (1, Cout)    f32 BN scale gamma / sqrt(var + eps)
    shift_ref: (1, Cout)    f32 folded conv-bias + BN shift
    ctx_ref:   (1, Cout)    f32 context vector for this batch element
    o_ref:     (THW, Cout)  output tile already in the module's final layout
    """
    x = x_ref[...].astype(jnp.bfloat16)        # no-op if fed bf16 upstream
    # (THW, Cout) = x^T @ w : contract Cin (dim 0 of both operands) on the
    # MXU, bf16 x bf16 -> f32 accumulation.  Writing (THW, Cout) directly
    # fuses the module's permute(0, 2, 1) into the kernel store.
    z = jax.lax.dot_general(
        x, w_ref[...],
        dimension_numbers=(((0,), (0,)), ((), ())),
        preferred_element_type=jnp.float32)
    y = jnp.maximum(z * scale_ref[...] + shift_ref[...], 0.0)   # BN + ReLU
    y = y + ctx_ref[...]                       # + context (after ReLU, as in module)
    o_ref[...] = y.astype(o_ref.dtype)


def _round_up(x, m):
    return ((x + m - 1) // m) * m


def _pick_tile_hw(hw, cin, cout, in_bytes, out_bytes, batch):
    """VMEM-budget tile size.

    Biggest lane-dense HW tile whose double-buffered (input + output) pair
    stays under ~24 MiB (headroom inside the 32 MiB scoped default; safe on
    v7x's 64 MiB physical VMEM), capped at 8192 lanes (HBM BW saturates by
    ~1-2k per the tiled roofline), while keeping >= 2 total grid steps so
    both v7x TensorCores get work.
    """
    per_lane = 2 * (cin * in_bytes + cout * out_bytes)   # double-buffered bytes/lane
    budget = 24 * 1024 * 1024
    thw = min(budget // per_lane, 8192, _round_up(hw, 128))
    thw = max(128, (thw // 128) * 128)
    if batch * pl.cdiv(hw, thw) < 2:                      # keep both v7x cores busy
        thw = max(128, ((hw // 2) // 128) * 128)
    return thw


@partial(jax.jit, static_argnames=("out_dtype",))
def feature_map_encoder(x_nchw, w_t_bf16, scale, shift, context,
                        out_dtype=jnp.float32):
    """Fused grouped 1x1 conv + BN(eval) + ReLU + context add + permute.

    x_nchw:   (B, Cin, H, W) f32 or bf16 (feed bf16 upstream to halve input DMA)
    w_t_bf16: (Cin, Cout)    bf16 dense block-diagonal weight, transposed
    scale:    (Cout,)        f32 BN scale gamma / sqrt(var + eps)
    shift:    (Cout,)        f32 folded conv-bias + BN shift
    context:  (B, Cout)      f32 (or None)
    returns:  (B, H*W, Cout) out_dtype -- same layout as the PyTorch module
    """
    B, Cin, H, W = x_nchw.shape
    Cout = w_t_bf16.shape[1]
    HW = H * W

    x = x_nchw.reshape(B, Cin, HW)            # free view: NO NCHW->NHWC transpose
    if context is None:
        context = jnp.zeros((B, Cout), dtype=jnp.float32)
    ctx = context.astype(jnp.float32).reshape(B, 1, Cout)
    scale2 = scale.astype(jnp.float32).reshape(1, Cout)
    shift2 = shift.astype(jnp.float32).reshape(1, Cout)

    in_bytes = x.dtype.itemsize
    out_bytes = jnp.dtype(out_dtype).itemsize
    thw = _pick_tile_hw(HW, Cin, Cout, in_bytes, out_bytes, B)
    hw_pad = _round_up(HW, thw)
    if hw_pad != HW:
        # TODO(synk): padded tail is computed and sliced off; a masked last
        # tile would avoid this extra pad pass for very ragged HW.
        x = jnp.pad(x, ((0, 0), (0, 0), (0, hw_pad - HW)))

    grid = (B, hw_pad // thw)

    out = pl.pallas_call(
        _encoder_kernel,
        out_shape=jax.ShapeDtypeStruct((B, hw_pad, Cout), out_dtype),
        grid=grid,
        in_specs=[
            pl.BlockSpec((pl.Squeezed(), Cin, thw), lambda b, t: (b, 0, t)),
            pl.BlockSpec((Cin, Cout), lambda b, t: (0, 0)),
            pl.BlockSpec((1, Cout), lambda b, t: (0, 0)),
            pl.BlockSpec((1, Cout), lambda b, t: (0, 0)),
            pl.BlockSpec((pl.Squeezed(), 1, Cout), lambda b, t: (b, 0, 0)),
        ],
        out_specs=pl.BlockSpec((pl.Squeezed(), thw, Cout), lambda b, t: (b, t, 0)),
        compiler_params=pltpu.CompilerParams(
            dimension_semantics=("parallel", "parallel"),
            vmem_limit_bytes=32 * 1024 * 1024,   # explicit, safe on v5e/v6e/v7x
        ),
    )(x, w_t_bf16, scale2, shift2, ctx)

    if hw_pad != HW:
        out = out[:, :HW, :]
    return out


def make_params(key, input_dim, n_embed, groups=32):
    """Synthetic parameters matching the nn.Module, pre-folded for the kernel.

    Returns (w_dense_f32, bn_scale, shift):
      w_dense_f32: (n_embed, input_dim) dense block-diagonal grouped-conv weight
                   (UNscaled; BN scale is applied in the f32 kernel epilogue).
      bn_scale:    (n_embed,) gamma / sqrt(running_var + eps)
      shift:       (n_embed,) folded conv-bias + BN shift.
    """
    cig = input_dim // groups   # in-channels per group
    cog = n_embed // groups     # out-channels per group
    k = jax.random.split(key, 6)

    # Conv2d(input_dim, n_embed, 1, 1, 0, groups=32): weight (n_embed, cig, 1, 1)
    conv_w = 0.1 * jax.random.normal(k[0], (n_embed, cig), dtype=jnp.float32)
    conv_b = 0.1 * jax.random.normal(k[1], (n_embed,), dtype=jnp.float32)

    # BatchNorm2d(n_embed) params / running stats (eval mode).
    gamma = 1.0 + 0.1 * jax.random.normal(k[2], (n_embed,), dtype=jnp.float32)
    beta = 0.1 * jax.random.normal(k[3], (n_embed,), dtype=jnp.float32)
    running_mean = 0.1 * jax.random.normal(k[4], (n_embed,), dtype=jnp.float32)
    running_var = 1.0 + 0.1 * jnp.abs(
        jax.random.normal(k[5], (n_embed,), dtype=jnp.float32))
    eps = 1e-5

    # Dense block-diagonal (Cout, Cin): exact equivalent of the grouped 1x1
    # conv.  NOTE: only sensible at small channel counts (here cig=cog=2); if
    # channels scale up, switch to a per-group (G, cog, cig) layout plus a
    # group grid axis instead of paying Gx wasted MXU FLOPs / weight bytes.
    wg = conv_w.reshape(groups, cog, cig)                       # (G, cog, cig)
    w_dense = jax.scipy.linalg.block_diag(*[wg[g] for g in range(groups)])
    w_dense = jnp.asarray(w_dense, dtype=jnp.float32)           # (Cout, Cin)

    # BN(eval) folding: y = ((W@x + b) - mean) * s + beta = (W@x)*s + shift
    bn_scale = gamma / jnp.sqrt(running_var + eps)
    shift = (conv_b - running_mean) * bn_scale + beta
    return w_dense, bn_scale, shift


def reference(x_nchw, w_dense_f32, bn_scale, shift, context):
    """Pure-JAX f32 reference with identical semantics to the PyTorch module."""
    B, Cin, H, W = x_nchw.shape
    x = x_nchw.reshape(B, Cin, H * W).astype(jnp.float32)
    z = jnp.einsum("oc,bcs->bos", w_dense_f32, x)                # (B, Cout, HW)
    y = jnp.maximum(z * bn_scale[None, :, None] + shift[None, :, None], 0.0)
    if context is not None:
        y = y + context[:, :, None]
    return jnp.transpose(y, (0, 2, 1))                           # (B, HW, Cout)


if __name__ == "__main__":
    # Small shapes consistent with the module (groups=32 => channels % 32 == 0).
    B, input_dim, n_embed, H, W = 2, 64, 64, 16, 16

    key = jax.random.PRNGKey(0)
    kx, kc, kp = jax.random.split(key, 3)
    fea_map = jax.random.normal(kx, (B, input_dim, H, W), dtype=jnp.float32)
    context = 0.5 * jax.random.normal(kc, (B, n_embed), dtype=jnp.float32)

    w_dense, bn_scale, shift = make_params(kp, input_dim, n_embed, groups=32)
    # One-time param prep: transpose to (Cin, Cout) + bf16 cast (bf16 MXU path).
    w_t_bf16 = jnp.asarray(w_dense.T, dtype=jnp.bfloat16)

    out = feature_map_encoder(fea_map, w_t_bf16, bn_scale, shift, context)
    out = jax.block_until_ready(out)

    ref = reference(fea_map, w_dense, bn_scale, shift, context)
    assert out.shape == (B, H * W, n_embed), out.shape
    # bf16 matmul operands (f32 accumulation, f32 BN epilogue) vs f32 reference.
    assert jnp.allclose(out, ref, atol=1e-2, rtol=1e-2), (
        "mismatch vs reference, max abs err = "
        + str(float(jnp.max(jnp.abs(out - ref)))))

    print("KERNEL_OK")
</pallas_src>

<mosaic_0001>
module attributes {stable_mosaic.version = 11 : i64} {
  func.func @_encoder_kernel(%arg0: i32, %arg1: i32, %arg2: memref<1x64x256xf32, #tpu.memory_space<vmem>>, %arg3: memref<64x64xbf16, #tpu.memory_space<vmem>>, %arg4: memref<1x64xf32, #tpu.memory_space<vmem>>, %arg5: memref<1x64xf32, #tpu.memory_space<vmem>>, %arg6: memref<1x1x64xf32, #tpu.memory_space<vmem>>, %arg7: memref<1x256x64xf32, #tpu.memory_space<vmem>>) attributes {dimension_semantics = [#tpu.dimension_semantics<parallel>, #tpu.dimension_semantics<parallel>], iteration_bounds = array<i64: 2, 1>, scalar_prefetch = 0 : i64, scratch_operands = 0 : i64, tpu.core_type = #tpu.core_type<tc>, window_params = [{transform_indices = @transform_0, window_bounds = array<i64: 1, 64, 256>}, {pipeline_mode = #tpu.pipeline_mode<synchronous>, transform_indices = @transform_1, window_bounds = array<i64: 64, 64>}, {pipeline_mode = #tpu.pipeline_mode<synchronous>, transform_indices = @transform_2, window_bounds = array<i64: 1, 64>}, {pipeline_mode = #tpu.pipeline_mode<synchronous>, transform_indices = @transform_3, window_bounds = array<i64: 1, 64>}, {transform_indices = @transform_4, window_bounds = array<i64: 1, 1, 64>}, {transform_indices = @transform_5, window_bounds = array<i64: 1, 256, 64>}]} {
    %c0 = arith.constant 0 : index
    %c0_0 = arith.constant 0 : index
    %c0_1 = arith.constant 0 : index
    %0 = vector.load %arg2[%c0, %c0_0, %c0_1] : memref<1x64x256xf32, #tpu.memory_space<vmem>>, vector<1x64x256xf32>
    %1 = vector.shape_cast %0 : vector<1x64x256xf32> to vector<64x256xf32>
    %2 = arith.truncf %1 : vector<64x256xf32> to vector<64x256xbf16>
    %c0_2 = arith.constant 0 : index
    %c0_3 = arith.constant 0 : index
    %3 = vector.load %arg3[%c0_2, %c0_3] : memref<64x64xbf16, #tpu.memory_space<vmem>>, vector<64x64xbf16>
    %cst = arith.constant dense<0.000000e+00> : vector<256x64xf32>
    %4 = tpu.matmul %2, %3, %cst {dimension_numbers = #tpu.dot_dimension_numbers<[0], [0], [1], [1], [0, 1, 1, 1], [], []>} : vector<64x256xbf16>, vector<64x64xbf16>, vector<256x64xf32> -> vector<256x64xf32>
    %c0_4 = arith.constant 0 : index
    %c0_5 = arith.constant 0 : index
    %5 = vector.load %arg4[%c0_4, %c0_5] : memref<1x64xf32, #tpu.memory_space<vmem>>, vector<1x64xf32>
    %6 = vector.broadcast %5 : vector<1x64xf32> to vector<256x64xf32>
    %7 = arith.mulf %4, %6 : vector<256x64xf32>
    %c0_6 = arith.constant 0 : index
    %c0_7 = arith.constant 0 : index
    %8 = vector.load %arg5[%c0_6, %c0_7] : memref<1x64xf32, #tpu.memory_space<vmem>>, vector<1x64xf32>
    %9 = vector.broadcast %8 : vector<1x64xf32> to vector<256x64xf32>
    %10 = arith.addf %7, %9 : vector<256x64xf32>
    %cst_8 = arith.constant 0.000000e+00 : f32
    %11 = vector.broadcast %cst_8 : f32 to vector<256x64xf32>
    %12 = arith.maximumf %10, %11 : vector<256x64xf32>
    %c0_9 = arith.constant 0 : index
    %c0_10 = arith.constant 0 : index
    %c0_11 = arith.constant 0 : index
    %13 = vector.load %arg6[%c0_9, %c0_10, %c0_11] : memref<1x1x64xf32, #tpu.memory_space<vmem>>, vector<1x1x64xf32>
    %14 = vector.shape_cast %13 : vector<1x1x64xf32> to vector<1x64xf32>
    %15 = vector.broadcast %14 : vector<1x64xf32> to vector<256x64xf32>
    %16 = arith.addf %12, %15 : vector<256x64xf32>
    %c0_12 = arith.constant 0 : index
    %c0_13 = arith.constant 0 : index
    %c0_14 = arith.constant 0 : index
    %17 = vector.load %arg7[%c0_12, %c0_13, %c0_14] : memref<1x256x64xf32, #tpu.memory_space<vmem>>, vector<1x256x64xf32>
    %18 = vector.shape_cast %17 : vector<1x256x64xf32> to vector<256x64xf32>
    %19 = vector.shape_cast %16 : vector<256x64xf32> to vector<1x256x64xf32>
    tpu.vector_store %arg7[%c0_12, %c0_13, %c0_14], %19 {strides = array<i32>} : memref<1x256x64xf32, #tpu.memory_space<vmem>>, vector<1x256x64xf32>,
    return
  }
  func.func @transform_0(%arg0: i32, %arg1: i32) -> (i32, i32, i32) {
    %c0_i32 = arith.constant 0 : i32
    %c0_i32_0 = arith.constant 0 : i32
    return %arg0, %c0_i32, %arg1 : i32, i32, i32
  }
  func.func @transform_1(%arg0: i32, %arg1: i32) -> (i32, i32) {
    %c0_i32 = arith.constant 0 : i32
    %c0_i32_0 = arith.constant 0 : i32
    %c0_i32_1 = arith.constant 0 : i32
    return %c0_i32, %c0_i32_0 : i32, i32
  }
  func.func @transform_2(%arg0: i32, %arg1: i32) -> (i32, i32) {
    %c0_i32 = arith.constant 0 : i32
    %c0_i32_0 = arith.constant 0 : i32
    %c0_i32_1 = arith.constant 0 : i32
    return %c0_i32, %c0_i32_0 : i32, i32
  }
  func.func @transform_3(%arg0: i32, %arg1: i32) -> (i32, i32) {
    %c0_i32 = arith.constant 0 : i32
    %c0_i32_0 = arith.constant 0 : i32
    %c0_i32_1 = arith.constant 0 : i32
    return %c0_i32, %c0_i32_0 : i32, i32
  }
  func.func @transform_4(%arg0: i32, %arg1: i32) -> (i32, i32, i32) {
    %c0_i32 = arith.constant 0 : i32
    %c0_i32_0 = arith.constant 0 : i32
    %c0_i32_1 = arith.constant 0 : i32
    return %arg0, %c0_i32, %c0_i32_0 : i32, i32, i32
  }
  func.func @transform_5(%arg0: i32, %arg1: i32) -> (i32, i32, i32) {
    %c0_i32 = arith.constant 0 : i32
    %c0_i32_0 = arith.constant 0 : i32
    return %arg0, %arg1, %c0_i32 : i32, i32, i32
  }
}

</mosaic_0001>

<llo_original>
// kernel: feature_map_encoder.1
$region0: #{feature_map_encoder.1}
  #allocation0 [shape = 'u32[]', space=smem, size = 0x4, offset = 0x4, fixed_abs, tag = 'smem constant byte address 0x4 - core index']
  #allocation1 [shape = 'u32[72,128]{1,0:T(1,128)}', space=vmem, size = 0x9000, scoped, tag = 'internal scratch']
  %s0 = inlined_call_operand.vmem [shape: f32[2,64,256], index: 0, kind: input, shape index: {}]
  %s1 = inlined_call_operand.vmem [shape: bf16[64,64], index: 1, kind: input, shape index: {}]
  %s2 = inlined_call_operand.vmem [shape: f32[1,64], index: 2, kind: input, shape index: {}]
  %s3 = inlined_call_operand.vmem [shape: f32[1,64], index: 3, kind: input, shape index: {}]
  %s4 = inlined_call_operand.vmem [shape: f32[2,1,64], index: 4, kind: input, shape index: {}]
  %s5 = inlined_call_operand.vmem [shape: f32[2,256,64], index: 5, kind: output, shape index: {}]
  %s6 = sld [smem:[#allocation0]]
  $region53: #{feature_map_encoder.1} parent=0
    _
  %s8 = ssub.s32 1, %s6
  %s9 = scalar_select 0, %s8, %s6
  loop: start=0, step=1, limit=4
  $region2: #{feature_map_encoder.1} parent=0 // loop_pre_header
    _
  $region3: #{feature_map_encoder.1} parent=0 // loop_header
    %s11 = sphi 0, %s15
    %p12 = scmp.ge.s32.totalorder %s11, 4
    %s18 = sphi 0, %s30
    %s19 = sphi 0, %s26
    %s20 = sphi 0, %s18
    %s21 = sphi 0, %s19
    %s22 = sphi 0, %s20
    %s23 = sphi 0, %s21
    %s35 = sphi 0, %s37
    %s38 = sphi 0, %s35
    %s39 = sphi 0, %s38
    %s55 = sphi 0, %s39
    %s59 = sphi 0, %s59
    %s61 = sphi 0, %s59
    %s62 = sphi 0, %s61
    %s76 = sphi 0, %s62
    %s80 = sphi 0, %s80
    %s82 = sphi 0, %s80
    %s83 = sphi 0, %s82
    %s97 = sphi 0, %s83
    %s101 = sphi 0, %s101
    %s103 = sphi 0, %s101
    %s104 = sphi 0, %s103
    %s118 = sphi 0, %s104
    %s124 = sphi 0, %s126
    %s127 = sphi 0, %s124
    %s128 = sphi 0, %s127
    %s144 = sphi 0, %s128
    %s152 = sphi 0, %s154
    %s155 = sphi 0, %s152
    %s156 = sphi 0, %s155
    %s172 = sphi 0, %s156
  $region4: #{feature_map_encoder.1} parent=0 // loop_header_branch
    %14 = sbr.rel (%p12) target = $region8
  $region5: #{feature_map_encoder.1} parent=0 // loop_body
    %s16 = ssub.s32 %s11, 1
    %s17 = ssub.s32 %s11, 2
    %s24 = sadd.s32 1, %s19
    %p25 = scmp.ge.s32.totalorder %s24, 1
    %s26 = scalar_select %p25, 0, %s24
    %s27 = sadd.s32 1, %s18
    %s28 = scalar_select %p25, %s27, %s18
    %p29 = scmp.ge.s32.totalorder %s28, 2
    %s30 = scalar_select %p29, 0, %s28
    %s31 = ssub.s32 %s18, %s30
    %s32 = ssub.s32 %s19, %s26
    %s33 = sor.u32 %s31, %s32
    %p34 = scmp.eq.s32.totalorder %s33, 0
    %s36 = sadd.s32 %s35, 1
    %s37 = scalar_select %p34, %s35, %s36
    %p40 = pneg %p34
    %p41 = scmp.eq.s32.totalorder %s11, 1
    %p42 = por %p40, %p41
    %p43 = scmp.ne.s32.totalorder %s35, %s38
    %p44 = scmp.eq.s32.totalorder %s11, 0
    %p45 = por %p43, %p44
    %p46 = scmp.ne.s32.totalorder %s35, %s38
    %p47 = scmp.eq.s32.totalorder %s16, 1
    %p48 = por %p46, %p47
    %p49 = scmp.ne.s32.totalorder %s38, %s39
    %p50 = scmp.eq.s32.totalorder %s16, 0
    %p51 = por %p49, %p50
    %p52 = scmp.ne.s32.totalorder %s38, %s39
    %p53 = scmp.eq.s32.totalorder %s17, 1
    %p54 = por %p52, %p53
    %p56 = scmp.ne.s32.totalorder %s39, %s55
    %p57 = scmp.eq.s32.totalorder %s17, 0
    %p58 = por %p56, %p57
    %s60 = sadd.s32 %s59, 1
    %p63 = scmp.eq.s32.totalorder %s11, 1
    %p64 = scmp.ne.s32.totalorder %s59, %s61
    %p65 = scmp.eq.s32.totalorder %s11, 0
    %p66 = por %p64, %p65
    %p67 = scmp.ne.s32.totalorder %s59, %s61
    %p68 = scmp.eq.s32.totalorder %s16, 1
    %p69 = por %p67, %p68
    %p70 = scmp.ne.s32.totalorder %s61, %s62
    %p71 = scmp.eq.s32.totalorder %s16, 0
    %p72 = por %p70, %p71
    %p73 = scmp.ne.s32.totalorder %s61, %s62
    %p74 = scmp.eq.s32.totalorder %s17, 1
    %p75 = por %p73, %p74
    %p77 = scmp.ne.s32.totalorder %s62, %s76
    %p78 = scmp.eq.s32.totalorder %s17, 0
    %p79 = por %p77, %p78
    %s81 = sadd.s32 %s80, 1
    %p84 = scmp.eq.s32.totalorder %s11, 1
    %p85 = scmp.ne.s32.totalorder %s80, %s82
    %p86 = scmp.eq.s32.totalorder %s11, 0
    %p87 = por %p85, %p86
    %p88 = scmp.ne.s32.totalorder %s80, %s82
    %p89 = scmp.eq.s32.totalorder %s16, 1
    %p90 = por %p88, %p89
    %p91 = scmp.ne.s32.totalorder %s82, %s83
    %p92 = scmp.eq.s32.totalorder %s16, 0
    %p93 = por %p91, %p92
    %p94 = scmp.ne.s32.totalorder %s82, %s83
    %p95 = scmp.eq.s32.totalorder %s17, 1
    %p96 = por %p94, %p95
    %p98 = scmp.ne.s32.totalorder %s83, %s97
    %p99 = scmp.eq.s32.totalorder %s17, 0
    %p100 = por %p98, %p99
    %s102 = sadd.s32 %s101, 1
    %p105 = scmp.eq.s32.totalorder %s11, 1
    %p106 = scmp.ne.s32.totalorder %s101, %s103
    %p107 = scmp.eq.s32.totalorder %s11, 0
    %p108 = por %p106, %p107
    %p109 = scmp.ne.s32.totalorder %s101, %s103
    %p110 = scmp.eq.s32.totalorder %s16, 1
    %p111 = por %p109, %p110
    %p112 = scmp.ne.s32.totalorder %s103, %s104
    %p113 = scmp.eq.s32.totalorder %s16, 0
    %p114 = por %p112, %p113
    %p115 = scmp.ne.s32.totalorder %s103, %s104
    %p116 = scmp.eq.s32.totalorder %s17, 1
    %p117 = por %p115, %p116
    %p119 = scmp.ne.s32.totalorder %s104, %s118
    %p120 = scmp.eq.s32.totalorder %s17, 0
    %p121 = por %p119, %p120
    %s122 = ssub.s32 %s18, %s30
    %p123 = scmp.eq.s32.totalorder %s122, 0
    %s125 = sadd.s32 %s124, 1
    %s126 = scalar_select %p123, %s124, %s125
    %p129 = pneg %p123
    %p130 = scmp.eq.s32.totalorder %s11, 1
    %p131 = por %p129, %p130
    %p132 = scmp.ne.s32.totalorder %s124, %s127
    %p133 = scmp.eq.s32.totalorder %s11, 0
    %p134 = por %p132, %p133
    %p135 = scmp.ne.s32.totalorder %s124, %s127
    %p136 = scmp.eq.s32.totalorder %s16, 1
    %p137 = por %p135, %p136
    %p138 = scmp.ne.s32.totalorder %s127, %s128
    %p139 = scmp.eq.s32.totalorder %s16, 0
    %p140 = por %p138, %p139
    %p141 = scmp.ne.s32.totalorder %s127, %s128
    %p142 = scmp.eq.s32.totalorder %s17, 1
    %p143 = por %p141, %p142
    %p145 = scmp.ne.s32.totalorder %s128, %s144
    %p146 = scmp.eq.s32.totalorder %s17, 0
    %p147 = por %p145, %p146
    %s148 = ssub.s32 %s18, %s30
    %s149 = ssub.s32 %s19, %s26
    %s150 = sor.u32 %s148, %s149
    %p151 = scmp.eq.s32.totalorder %s150, 0
    %s153 = sadd.s32 %s152, 1
    %s154 = scalar_select %p151, %s152, %s153
    %p157 = pneg %p151
    %p158 = scmp.eq.s32.totalorder %s11, 1
    %p159 = por %p157, %p158
    %p160 = scmp.ne.s32.totalorder %s152, %s155
    %p161 = scmp.eq.s32.totalorder %s11, 0
    %p162 = por %p160, %p161
    %p163 = scmp.ne.s32.totalorder %s152, %s155
    %p164 = scmp.eq.s32.totalorder %s16, 1
    %p165 = por %p163, %p164
    %p166 = scmp.ne.s32.totalorder %s155, %s156
    %p167 = scmp.eq.s32.totalorder %s16, 0
    %p168 = por %p166, %p167
    %p169 = scmp.ne.s32.totalorder %s155, %s156
    %p170 = scmp.eq.s32.totalorder %s17, 1
    %p171 = por %p169, %p170
    %p173 = scmp.ne.s32.totalorder %s156, %s172
    %p174 = scmp.eq.s32.totalorder %s17, 0
    %p175 = por %p173, %p174
    %p176 = scmp.le.s32.totalorder 1, %s11
    %p177 = scmp.lt.s32.totalorder %s11, 3
    %p178 = pnand %p176, %p177
    %p179 = pneg %p178
    // Predicated region
    $region9: #{feature_map_encoder.1} parent=5 // pred_check
      _
    $region10: #{feature_map_encoder.1} parent=5 // pred_check_branch
      %181 = sbr.rel (%p178) target = $region12
    $region11: #{feature_map_encoder.1} parent=5 // pred_region
      %s182 = ssub.s32 %s11, 1
      // Predicated region
      $region13: #{feature_map_encoder.1} parent=11 // pred_check
        %p183 = pneg %p72
      $region14: #{feature_map_encoder.1} parent=11 // pred_check_branch
        %185 = sbr.rel (%p183) target = $region16
      $region15: #{feature_map_encoder.1} parent=11 // pred_region
        _
      $region16: #{feature_map_encoder.1} parent=11 // pred_fallthru
        _
      // Predicated region
      $region17: #{feature_map_encoder.1} parent=11 // pred_check
        %p186 = pneg %p93
      $region18: #{feature_map_encoder.1} parent=11 // pred_check_branch
        %188 = sbr.rel (%p186) target = $region20
      $region19: #{feature_map_encoder.1} parent=11 // pred_region
        _
      $region20: #{feature_map_encoder.1} parent=11 // pred_fallthru
        _
      // Predicated region
      $region21: #{feature_map_encoder.1} parent=11 // pred_check
        %p189 = pneg %p114
      $region22: #{feature_map_encoder.1} parent=11 // pred_check_branch
        %191 = sbr.rel (%p189) target = $region24
      $region23: #{feature_map_encoder.1} parent=11 // pred_region
        _
      $region24: #{feature_map_encoder.1} parent=11 // pred_fallthru
        _
    $region12: #{feature_map_encoder.1} parent=5 // pred_fallthru
      _
    %p192 = scmp.lt.s32.totalorder %s11, 2
    // Predicated region
    $region25: #{feature_map_encoder.1} parent=5 // pred_check
      %p193 = pneg %p192
    $region26: #{feature_map_encoder.1} parent=5 // pred_check_branch
      %195 = sbr.rel (%p193) target = $region28
    $region27: #{feature_map_encoder.1} parent=5 // pred_region
      // Predicated region
      $region29: #{feature_map_encoder.1} parent=27 // pred_check
        %p196 = pneg %p45
      $region30: #{feature_map_encoder.1} parent=27 // pred_check_branch
        %198 = sbr.rel (%p196) target = $region32
      $region31: #{feature_map_encoder.1} parent=27 // pred_region
        %s199 = smul.u32 2, %s19
        %p200 = scmp.lt.s32.totalorder %s18, 1
        %s201 = scalar_select %p200, %s18, 1
        %p202 = scmp.lt.s32.totalorder %s199, 1
        %s203 = scalar_select %p202, %s199, 1
        %s204 = smul.addr %s201, 16
        %s205 = sadd.s32 %s203, %s204
        %s206 = smul.addr %s205, 8
        %s207 = scalar_lea.vmem %s0, %s206
        %s208 = smul.u32 2, %s19
      $region32: #{feature_map_encoder.1} parent=27 // pred_fallthru
        _
      // Predicated region
      $region33: #{feature_map_encoder.1} parent=27 // pred_check
        %p209 = pneg %p134
      $region34: #{feature_map_encoder.1} parent=27 // pred_check_branch
        %211 = sbr.rel (%p209) target = $region36
      $region35: #{feature_map_encoder.1} parent=27 // pred_region
        %p212 = scmp.lt.s32.totalorder %s18, 1
        %s213 = scalar_select %p212, %s18, 1
        %s214 = scalar_lea.vmem %s4, %s213
      $region36: #{feature_map_encoder.1} parent=27 // pred_fallthru
        _
    $region28: #{feature_map_encoder.1} parent=5 // pred_fallthru
      _
    %p215 = scmp.le.s32.totalorder 1, %s11
    %p216 = scmp.lt.s32.totalorder %s11, 3
    %p217 = pnand %p215, %p216
    %p218 = pneg %p217
    // Predicated region
    $region37: #{feature_map_encoder.1} parent=5 // pred_check
      _
    $region38: #{feature_map_encoder.1} parent=5 // pred_check_branch
      %220 = sbr.rel (%p217) target = $region40
    $region39: #{feature_map_encoder.1} parent=5 // pred_region
      %s221 = ssub.s32 %s11, 1
      %s222 = smul.u32 2, %s21
      %p223 = scmp.lt.s32.totalorder %s20, 1
      %s224 = scalar_select %p223, %s20, 1
      %p225 = scmp.lt.s32.totalorder %s222, 1
      %s226 = scalar_select %p225, %s222, 1
      %s227 = smul.addr %s224, 16
      %s228 = sadd.s32 %s226, %s227
      %s229 = smul.addr %s228, 8
      %s230 = scalar_lea.vmem %s0, %s229
      %p231 = pneg %p51
      %p232 = pneg %p48
      %p233 = pneg %p72
      %p234 = pneg %p69
      %p235 = pneg %p93
      %p236 = pneg %p90
      %p237 = pneg %p114
      %p238 = pneg %p111
      %p239 = scmp.lt.s32.totalorder %s20, 1
      %s240 = scalar_select %p239, %s20, 1
      %s241 = scalar_lea.vmem %s4, %s240
      %p242 = pneg %p140
      %p243 = pneg %p137
      %p244 = pneg %p168
      %p245 = pneg %p165
      %s246 = smul.u32 32, %s21
      %p247 = scmp.lt.s32.totalorder %s20, 1
      %s248 = scalar_select %p247, %s20, 1
      %p249 = scmp.lt.s32.totalorder %s246, 31
      %s250 = scalar_select %p249, %s246, 31
      %s251 = smul.addr %s248, 32
      %s252 = sadd.s32 %s250, %s251
      %s253 = smul.addr %s252, 8
      %s254 = scalar_lea.vmem %s5, %s253
      %s255 = smul.u32 2, %s21
      %p256 = scmp.lt.s32.totalorder %s20, 1
      %s257 = scalar_select %p256, %s20, 1
      %p258 = scmp.lt.s32.totalorder %s255, 1
      %s259 = scalar_select %p258, %s255, 1
      %s260 = smul.addr %s257, 16
      %s261 = sadd.s32 %s259, %s260
      %s262 = smul.addr %s261, 8
      %s263 = scalar_lea.vmem %s0, %s262
      %s264 = smul.u32 2, %s21
      %p265 = scmp.lt.s32.totalorder %s20, 1
      %s266 = scalar_select %p265, %s20, 1
      %s267 = scalar_lea.vmem %s4, %s266
      %s268 = smul.u32 32, %s21
      %p269 = scmp.lt.s32.totalorder %s20, 1
      %s270 = scalar_select %p269, %s20, 1
      %p271 = scmp.lt.s32.totalorder %s268, 31
      %s272 = scalar_select %p271, %s268, 31
      %s273 = smul.addr %s270, 32
      %s274 = sadd.s32 %s272, %s273
      %s275 = smul.addr %s274, 8
      %s276 = scalar_lea.vmem %s5, %s275
      %s277 = smul.u32 32, %s21
      %v279 = vld [vmem:[%s263] sm:$0xff]
      %v280 = vld [vmem:[%s263 + $0x8] sm:$0xff]
      %v281 = vld [vmem:[%s263 + $0x10] sm:$0xff]
      %v282 = vld [vmem:[%s263 + $0x18] sm:$0xff]
      %v283 = vld [vmem:[%s263 + $0x20] sm:$0xff]
      %v284 = vld [vmem:[%s263 + $0x28] sm:$0xff]
      %v285 = vld [vmem:[%s263 + $0x30] sm:$0xff]
      %v286 = vld [vmem:[%s263 + $0x38] sm:$0xff]
      %v287 = vld [vmem:[%s263 + $0x40] sm:$0xff]
      %v288 = vld [vmem:[%s263 + $0x48] sm:$0xff]
      %v289 = vld [vmem:[%s263 + $0x50] sm:$0xff]
      %v290 = vld [vmem:[%s263 + $0x58] sm:$0xff]
      %v291 = vld [vmem:[%s263 + $0x60] sm:$0xff]
      %v292 = vld [vmem:[%s263 + $0x68] sm:$0xff]
      %v293 = vld [vmem:[%s263 + $0x70] sm:$0xff]
      %v294 = vld [vmem:[%s263 + $0x78] sm:$0xff]
      %v295 = vpack.c.bf16 %v281, %v279
      %v296 = vpack.c.bf16 %v282, %v280
      %v297 = vpack.c.bf16 %v285, %v283
      %v298 = vpack.c.bf16 %v286, %v284
      %v299 = vpack.c.bf16 %v289, %v287
      %v300 = vpack.c.bf16 %v290, %v288
      %v301 = vpack.c.bf16 %v293, %v291
      %v302 = vpack.c.bf16 %v294, %v292
      %v303 = vld [vmem:[%s1] sm:$0xf]
      %v304 = vld [vmem:[%s1 + $0x4] sm:$0xf]
      %v305 = vld [vmem:[%s1 + $0x8] sm:$0xf]
      %v306 = vld [vmem:[%s1 + $0xc] sm:$0xf]
      %v307 = vld [vmem:[%s1 + $0x10] sm:$0xf]
      %v308 = vld [vmem:[%s1 + $0x14] sm:$0xf]
      %v309 = vld [vmem:[%s1 + $0x18] sm:$0xf]
      %v310 = vld [vmem:[%s1 + $0x1c] sm:$0xf]
      %311 = vxpose.binary.xlu0.c.b16.start [1/16] %v296, %v295, 128
      %312 = vxpose.binary.xlu0.c.b16.cont [2/16] %v298, %v297, 128
      %313 = vxpose.binary.xlu0.c.b16.cont [3/16] %v300, %v299, 128
      %314 = vxpose.binary.xlu0.c.b16.cont [4/16] %v302, %v301, 128
      %315 = vxpose.binary.xlu0.c.b16.cont [5/16] 0, 0, 128
      %316 = vxpose.binary.xlu0.c.b16.cont [6/16] 0, 0, 128
      %317 = vxpose.binary.xlu0.c.b16.cont [7/16] 0, 0, 128
      %318 = vxpose.binary.xlu0.c.b16.end [8/16] 0, 0, 128
      %v319 = vpop.trf.xlu0
      %v320 = vpop.trf.xlu0
      %v321 = vpop.trf.xlu0
      %v322 = vpop.trf.xlu0
      %v323 = vpop.trf.xlu0
      %v324 = vpop.trf.xlu0
      %v325 = vpop.trf.xlu0
      %v326 = vpop.trf.xlu0
      %v327 = vpop.trf.xlu0
      %v328 = vpop.trf.xlu0
      %v329 = vpop.trf.xlu0
      %v330 = vpop.trf.xlu0
      %v331 = vpop.trf.xlu0
      %v332 = vpop.trf.xlu0
      %v333 = vpop.trf.xlu0
      %v334 = vpop.trf.xlu0
      %v343 = vunpack.c.l.b16 %v303
      %v344 = vunpack.c.l.b16 %v304
      %v345 = vunpack.c.l.b16 %v305
      %v346 = vunpack.c.l.b16 %v306
      %v347 = vunpack.c.l.b16 %v307
      %v348 = vunpack.c.l.b16 %v308
      %v349 = vunpack.c.l.b16 %v309
      %v350 = vunpack.c.l.b16 %v310
      %v351 = vpack.c.b16 %v344, %v343
      %v352 = vpack.c.b16 %v346, %v345
      %v353 = vpack.c.b16 %v348, %v347
      %v354 = vpack.c.b16 %v350, %v349
      %vm359 = vcmask 523264
      %v361 = vsel %vm359, %v319, 0
      %v364 = vsel %vm359, %v321, 0
      %v367 = vsel %vm359, %v323, 0
      %v370 = vsel %vm359, %v325, 0
      %v373 = vsel %vm359, %v327, 0
      %v376 = vsel %vm359, %v329, 0
      %v379 = vsel %vm359, %v331, 0
      %v382 = vsel %vm359, %v333, 0
      %v385 = vsel %vm359, %v320, 0
      %v388 = vsel %vm359, %v322, 0
      %v391 = vsel %vm359, %v324, 0
      %v394 = vsel %vm359, %v326, 0
      %v397 = vsel %vm359, %v328, 0
      %v400 = vsel %vm359, %v330, 0
      %v403 = vsel %vm359, %v332, 0
      %v406 = vsel %vm359, %v334, 0
      %408 = vmatpush.bf16.msra.mxu0 0
      %409 = vmatpush.bf16.msra.mxu0 0
      %410 = vmatpush.bf16.msra.mxu0 0
      %411 = vmatpush.bf16.msra.mxu0 0
      %412 = vmatpush.bf16.msra.mxu0 %v354
      %413 = vmatpush.bf16.msra.mxu0 %v353
      %414 = vmatpush.bf16.msra.mxu0 %v352
      %415 = vmatpush.bf16.msra.mxu0 %v351
      %416 = vmatmul.bf16.gmra.mxu0 %v361
      %v417 = vpop.f32.mrf.mxu0
      %v418 = vadd.f32 0.0, %v417
      %v419 = vpop.f32.mrf.mxu0
      %v420 = vadd.f32 0.0, %v419
      %421 = vmatmul.bf16.gmra.mxu0 %v364
      %v422 = vpop.f32.mrf.mxu0
      %v423 = vadd.f32 0.0, %v422
      %v424 = vpop.f32.mrf.mxu0
      %v425 = vadd.f32 0.0, %v424
      %426 = vmatmul.bf16.gmra.mxu0 %v367
      %v427 = vpop.f32.mrf.mxu0
      %v428 = vadd.f32 0.0, %v427
      %v429 = vpop.f32.mrf.mxu0
      %v430 = vadd.f32 0.0, %v429
      %431 = vmatmul.bf16.gmra.mxu0 %v370
      %v432 = vpop.f32.mrf.mxu0
      %v433 = vadd.f32 0.0, %v432
      %v434 = vpop.f32.mrf.mxu0
      %v435 = vadd.f32 0.0, %v434
      %436 = vmatmul.bf16.gmra.mxu0 %v373
      %v437 = vpop.f32.mrf.mxu0
      %v438 = vadd.f32 0.0, %v437
      %v439 = vpop.f32.mrf.mxu0
      %v440 = vadd.f32 0.0, %v439
      %441 = vmatmul.bf16.gmra.mxu0 %v376
      %v442 = vpop.f32.mrf.mxu0
      %v443 = vadd.f32 0.0, %v442
      %v444 = vpop.f32.mrf.mxu0
      %v445 = vadd.f32 0.0, %v444
      %446 = vmatmul.bf16.gmra.mxu0 %v379
      %v447 = vpop.f32.mrf.mxu0
      %v448 = vadd.f32 0.0, %v447
      %v449 = vpop.f32.mrf.mxu0
      %v450 = vadd.f32 0.0, %v449
      %451 = vmatmul.bf16.gmra.mxu0 %v382
      %v452 = vpop.f32.mrf.mxu0
      %v453 = vadd.f32 0.0, %v452
      %v454 = vpop.f32.mrf.mxu0
      %v455 = vadd.f32 0.0, %v454
      %456 = vmatmul.bf16.gmra.mxu0 %v385
      %v457 = vpop.f32.mrf.mxu0
      %v458 = vadd.f32 0.0, %v457
      %v459 = vpop.f32.mrf.mxu0
      %v460 = vadd.f32 0.0, %v459
      %461 = vmatmul.bf16.gmra.mxu0 %v388
      %v462 = vpop.f32.mrf.mxu0
      %v463 = vadd.f32 0.0, %v462
      %v464 = vpop.f32.mrf.mxu0
      %v465 = vadd.f32 0.0, %v464
      %466 = vmatmul.bf16.gmra.mxu0 %v391
      %v467 = vpop.f32.mrf.mxu0
      %v468 = vadd.f32 0.0, %v467
      %v469 = vpop.f32.mrf.mxu0
      %v470 = vadd.f32 0.0, %v469
      %471 = vmatmul.bf16.gmra.mxu0 %v394
      %v472 = vpop.f32.mrf.mxu0
      %v473 = vadd.f32 0.0, %v472
      %v474 = vpop.f32.mrf.mxu0
      %v475 = vadd.f32 0.0, %v474
      %476 = vmatmul.bf16.gmra.mxu0 %v397
      %v477 = vpop.f32.mrf.mxu0
      %v478 = vadd.f32 0.0, %v477
      %v479 = vpop.f32.mrf.mxu0
      %v480 = vadd.f32 0.0, %v479
      %481 = vmatmul.bf16.gmra.mxu0 %v400
      %v482 = vpop.f32.mrf.mxu0
      %v483 = vadd.f32 0.0, %v482
      %v484 = vpop.f32.mrf.mxu0
      %v485 = vadd.f32 0.0, %v484
      %486 = vmatmul.bf16.gmra.mxu0 %v403
      %v487 = vpop.f32.mrf.mxu0
      %v488 = vadd.f32 0.0, %v487
      %v489 = vpop.f32.mrf.mxu0
      %v490 = vadd.f32 0.0, %v489
      %491 = vmatmul.bf16.gmra.mxu0 %v406
      %v492 = vpop.f32.mrf.mxu0
      %v493 = vadd.f32 0.0, %v492
      %v494 = vpop.f32.mrf.mxu0
      %v495 = vadd.f32 0.0, %v494
      %496 = vdwg.mxu0
      %v497 = vld [vmem:[%s2] sm:$0x1]
      %v499 = vperm.slane %v497, 0
      %v501 = vmul.f32 %v418, %v499
      %v502 = vmul.f32 %v420, %v499
      %v503 = vmul.f32 %v423, %v499
      %v504 = vmul.f32 %v425, %v499
      %v505 = vmul.f32 %v428, %v499
      %v506 = vmul.f32 %v430, %v499
      %v507 = vmul.f32 %v433, %v499
      %v508 = vmul.f32 %v435, %v499
      %v509 = vmul.f32 %v438, %v499
      %v510 = vmul.f32 %v440, %v499
      %v511 = vmul.f32 %v443, %v499
      %v512 = vmul.f32 %v445, %v499
      %v513 = vmul.f32 %v448, %v499
      %v514 = vmul.f32 %v450, %v499
      %v515 = vmul.f32 %v453, %v499
      %v516 = vmul.f32 %v455, %v499
      %v517 = vmul.f32 %v458, %v499
      %v518 = vmul.f32 %v460, %v499
      %v519 = vmul.f32 %v463, %v499
      %v520 = vmul.f32 %v465, %v499
      %v521 = vmul.f32 %v468, %v499
      %v522 = vmul.f32 %v470, %v499
      %v523 = vmul.f32 %v473, %v499
      %v524 = vmul.f32 %v475, %v499
      %v525 = vmul.f32 %v478, %v499
      %v526 = vmul.f32 %v480, %v499
      %v527 = vmul.f32 %v483, %v499
      %v528 = vmul.f32 %v485, %v499
      %v529 = vmul.f32 %v488, %v499
      %v530 = vmul.f32 %v490, %v499
      %v531 = vmul.f32 %v493, %v499
      %v532 = vmul.f32 %v495, %v499
      %v533 = vld [vmem:[%s3] sm:$0x1]
      %v535 = vperm.slane %v533, 0
      %v537 = vadd.f32 %v501, %v535
      %v538 = vadd.f32 %v502, %v535
      %v539 = vadd.f32 %v503, %v535
      %v540 = vadd.f32 %v504, %v535
      %v541 = vadd.f32 %v505, %v535
      %v542 = vadd.f32 %v506, %v535
      %v543 = vadd.f32 %v507, %v535
      %v544 = vadd.f32 %v508, %v535
      %v545 = vadd.f32 %v509, %v535
      %v546 = vadd.f32 %v510, %v535
      %v547 = vadd.f32 %v511, %v535
      %v548 = vadd.f32 %v512, %v535
      %v549 = vadd.f32 %v513, %v535
      %v550 = vadd.f32 %v514, %v535
      %v551 = vadd.f32 %v515, %v535
      %v552 = vadd.f32 %v516, %v535
      %v553 = vadd.f32 %v517, %v535
      %v554 = vadd.f32 %v518, %v535
      %v555 = vadd.f32 %v519, %v535
      %v556 = vadd.f32 %v520, %v535
      %v557 = vadd.f32 %v521, %v535
      %v558 = vadd.f32 %v522, %v535
      %v559 = vadd.f32 %v523, %v535
      %v560 = vadd.f32 %v524, %v535
      %v561 = vadd.f32 %v525, %v535
      %v562 = vadd.f32 %v526, %v535
      %v563 = vadd.f32 %v527, %v535
      %v564 = vadd.f32 %v528, %v535
      %v565 = vadd.f32 %v529, %v535
      %v566 = vadd.f32 %v530, %v535
      %v567 = vadd.f32 %v531, %v535
      %v568 = vadd.f32 %v532, %v535
      %v569 = vmax.f32 %v537, 0.0
      %v570 = vmax.f32 %v538, 0.0
      %v571 = vmax.f32 %v539, 0.0
      %v572 = vmax.f32 %v540, 0.0
      %v573 = vmax.f32 %v541, 0.0
      %v574 = vmax.f32 %v542, 0.0
      %v575 = vmax.f32 %v543, 0.0
      %v576 = vmax.f32 %v544, 0.0
      %v577 = vmax.f32 %v545, 0.0
      %v578 = vmax.f32 %v546, 0.0
      %v579 = vmax.f32 %v547, 0.0
      %v580 = vmax.f32 %v548, 0.0
      %v581 = vmax.f32 %v549, 0.0
      %v582 = vmax.f32 %v550, 0.0
      %v583 = vmax.f32 %v551, 0.0
      %v584 = vmax.f32 %v552, 0.0
      %v585 = vmax.f32 %v553, 0.0
      %v586 = vmax.f32 %v554, 0.0
      %v587 = vmax.f32 %v555, 0.0
      %v588 = vmax.f32 %v556, 0.0
      %v589 = vmax.f32 %v557, 0.0
      %v590 = vmax.f32 %v558, 0.0
      %v591 = vmax.f32 %v559, 0.0
      %v592 = vmax.f32 %v560, 0.0
      %v593 = vmax.f32 %v561, 0.0
      %v594 = vmax.f32 %v562, 0.0
      %v595 = vmax.f32 %v563, 0.0
      %v596 = vmax.f32 %v564, 0.0
      %v597 = vmax.f32 %v565, 0.0
      %v598 = vmax.f32 %v566, 0.0
      %v599 = vmax.f32 %v567, 0.0
      %v600 = vmax.f32 %v568, 0.0
      %v601 = vld [vmem:[%s267] sm:$0x1]
      %v603 = vperm.slane %v601, 0
      %v605 = vadd.f32 %v569, %v603
      %v606 = vadd.f32 %v570, %v603
      %v607 = vadd.f32 %v571, %v603
      %v608 = vadd.f32 %v572, %v603
      %v609 = vadd.f32 %v573, %v603
      %v610 = vadd.f32 %v574, %v603
      %v611 = vadd.f32 %v575, %v603
      %v612 = vadd.f32 %v576, %v603
      %v613 = vadd.f32 %v577, %v603
      %v614 = vadd.f32 %v578, %v603
      %v615 = vadd.f32 %v579, %v603
      %v616 = vadd.f32 %v580, %v603
      %v617 = vadd.f32 %v581, %v603
      %v618 = vadd.f32 %v582, %v603
      %v619 = vadd.f32 %v583, %v603
      %v620 = vadd.f32 %v584, %v603
      %v621 = vadd.f32 %v585, %v603
      %v622 = vadd.f32 %v586, %v603
      %v623 = vadd.f32 %v587, %v603
      %v624 = vadd.f32 %v588, %v603
      %v625 = vadd.f32 %v589, %v603
      %v626 = vadd.f32 %v590, %v603
      %v627 = vadd.f32 %v591, %v603
      %v628 = vadd.f32 %v592, %v603
      %v629 = vadd.f32 %v593, %v603
      %v630 = vadd.f32 %v594, %v603
      %v631 = vadd.f32 %v595, %v603
      %v632 = vadd.f32 %v596, %v603
      %v633 = vadd.f32 %v597, %v603
      %v634 = vadd.f32 %v598, %v603
      %v635 = vadd.f32 %v599, %v603
      %v636 = vadd.f32 %v600, %v603
      %637 = vst.msk [vmem:[%s276] sm:$0xff] %vm359, %v605
      %638 = vst.msk [vmem:[%s276 + $0x8] sm:$0xff] %vm359, %v606
      %639 = vst.msk [vmem:[%s276 + $0x10] sm:$0xff] %vm359, %v607
      %640 = vst.msk [vmem:[%s276 + $0x18] sm:$0xff] %vm359, %v608
      %641 = vst.msk [vmem:[%s276 + $0x20] sm:$0xff] %vm359, %v609
      %642 = vst.msk [vmem:[%s276 + $0x28] sm:$0xff] %vm359, %v610
      %643 = vst.msk [vmem:[%s276 + $0x30] sm:$0xff] %vm359, %v611
      %644 = vst.msk [vmem:[%s276 + $0x38] sm:$0xff] %vm359, %v612
      %645 = vst.msk [vmem:[%s276 + $0x40] sm:$0xff] %vm359, %v613
      %646 = vst.msk [vmem:[%s276 + $0x48] sm:$0xff] %vm359, %v614
      %647 = vst.msk [vmem:[%s276 + $0x50] sm:$0xff] %vm359, %v615
      %648 = vst.msk [vmem:[%s276 + $0x58] sm:$0xff] %vm359, %v616
      %649 = vst.msk [vmem:[%s276 + $0x60] sm:$0xff] %vm359, %v617
      %650 = vst.msk [vmem:[%s276 + $0x68] sm:$0xff] %vm359, %v618
      %651 = vst.msk [vmem:[%s276 + $0x70] sm:$0xff] %vm359, %v619
      %652 = vst.msk [vmem:[%s276 + $0x78] sm:$0xff] %vm359, %v620
      %653 = vst.msk [vmem:[%s276 + $0x80] sm:$0xff] %vm359, %v621
      %654 = vst.msk [vmem:[%s276 + $0x88] sm:$0xff] %vm359, %v622
      %655 = vst.msk [vmem:[%s276 + $0x90] sm:$0xff] %vm359, %v623
      %656 = vst.msk [vmem:[%s276 + $0x98] sm:$0xff] %vm359, %v624
      %657 = vst.msk [vmem:[%s276 + $0xa0] sm:$0xff] %vm359, %v625
      %658 = vst.msk [vmem:[%s276 + $0xa8] sm:$0xff] %vm359, %v626
      %659 = vst.msk [vmem:[%s276 + $0xb0] sm:$0xff] %vm359, %v627
      %660 = vst.msk [vmem:[%s276 + $0xb8] sm:$0xff] %vm359, %v628
      %661 = vst.msk [vmem:[%s276 + $0xc0] sm:$0xff] %vm359, %v629
      %662 = vst.msk [vmem:[%s276 + $0xc8] sm:$0xff] %vm359, %v630
      %663 = vst.msk [vmem:[%s276 + $0xd0] sm:$0xff] %vm359, %v631
      %664 = vst.msk [vmem:[%s276 + $0xd8] sm:$0xff] %vm359, %v632
      %665 = vst.msk [vmem:[%s276 + $0xe0] sm:$0xff] %vm359, %v633
      %666 = vst.msk [vmem:[%s276 + $0xe8] sm:$0xff] %vm359, %v634
      %667 = vst.msk [vmem:[%s276 + $0xf0] sm:$0xff] %vm359, %v635
      %668 = vst.msk [vmem:[%s276 + $0xf8] sm:$0xff] %vm359, %v636
      %s669 = smul.u32 32, %s21
      %p670 = scmp.lt.s32.totalorder %s20, 1
      %s671 = scalar_select %p670, %s20, 1
      %p672 = scmp.lt.s32.totalorder %s669, 31
      %s673 = scalar_select %p672, %s669, 31
      %s674 = smul.addr %s671, 32
      %s675 = sadd.s32 %s673, %s674
      %s676 = smul.addr %s675, 8
      %s677 = scalar_lea.vmem %s5, %s676
      // Predicated region
      $region41: #{feature_map_encoder.1} parent=39 // pred_check
        %p678 = pneg %p165
      $region42: #{feature_map_encoder.1} parent=39 // pred_check_branch
        %680 = sbr.rel (%p678) target = $region44
      $region43: #{feature_map_encoder.1} parent=39 // pred_region
        %s681 = smul.u32 32, %s21
      $region44: #{feature_map_encoder.1} parent=39 // pred_fallthru
        _
    $region40: #{feature_map_encoder.1} parent=5 // pred_fallthru
      _
    %p682 = scmp.le.s32.totalorder 2, %s11
    // Predicated region
    $region45: #{feature_map_encoder.1} parent=5 // pred_check
      %p683 = pneg %p682
    $region46: #{feature_map_encoder.1} parent=5 // pred_check_branch
      %685 = sbr.rel (%p683) target = $region48
    $region47: #{feature_map_encoder.1} parent=5 // pred_region
      %s686 = ssub.s32 %s11, 2
      // Predicated region
      $region49: #{feature_map_encoder.1} parent=47 // pred_check
        %p687 = pneg %p171
      $region50: #{feature_map_encoder.1} parent=47 // pred_check_branch
        %689 = sbr.rel (%p687) target = $region52
      $region51: #{feature_map_encoder.1} parent=47 // pred_region
        %s690 = smul.u32 32, %s23
        %p691 = scmp.lt.s32.totalorder %s22, 1
        %s692 = scalar_select %p691, %s22, 1
        %p693 = scmp.lt.s32.totalorder %s690, 31
        %s694 = scalar_select %p693, %s690, 31
        %s695 = smul.addr %s692, 32
        %s696 = sadd.s32 %s694, %s695
        %s697 = smul.addr %s696, 8
        %s698 = scalar_lea.vmem %s5, %s697
      $region52: #{feature_map_encoder.1} parent=47 // pred_fallthru
        _
    $region48: #{feature_map_encoder.1} parent=5 // pred_fallthru
      _
  $region6: #{feature_map_encoder.1} parent=0 // loop_footer
    %s15 = sadd.s32 1, %s11
  $region7: #{feature_map_encoder.1} parent=0 // loop_footer_branch
    %10 = sbr.rel target = $region3
  $region8: #{feature_map_encoder.1} parent=0 // loop_exit
    _

</llo_original>
